<compile_context>
chip_gen: v6e
topology: v6e:2x2x1
jax: 0.10.0
libtpu: 0.0.40
codegen_flags: <defaults>
</compile_context>

<pallas_src>
import jax
import jax.numpy as jnp
from jax import lax
from jax.experimental import pallas as pl
from jax.experimental.pallas import tpu as pltpu


def _round_up(x, m):
    return ((x + m - 1) // m) * m


def _cdiv(a, b):
    return (a + b - 1) // b


def _make_linear_kernel(D, TK, mask_k_tail):
    """Kernel factory; D / TK / mask_k_tail are trace-time constants."""

    def kernel(x_ref, w_ref, b_ref, o_ref, acc_ref):
        # x_ref:  (TM, TK) VMEM          w_ref: (1, TK) VMEM (lane-dense)
        # b_ref:  (1,)  SMEM f32         o_ref: (TM, 1) VMEM
        # acc_ref:(TM, 1) f32 VMEM scratch
        k = pl.program_id(1)

        @pl.when(k == 0)
        def _():
            acc_ref[...] = jnp.zeros_like(acc_ref)

        x = x_ref[...]
        if mask_k_tail:
            # K-tail block overhangs the true D; zero the garbage columns so
            # they contribute nothing (and never inject NaNs) to the MXU sum.
            col = lax.broadcasted_iota(jnp.int32, x.shape, 1) + k * TK
            x = jnp.where(col < D, x, jnp.zeros_like(x))

        # MXU mat-vec: contract the lane dim of both operands (x @ w.T).
        acc_ref[...] += lax.dot_general(
            x,
            w_ref[...],
            dimension_numbers=(((1,), (1,)), ((), ())),
            preferred_element_type=jnp.float32,
        )

        @pl.when(k == pl.num_programs(1) - 1)
        def _():
            o_ref[...] = (acc_ref[...] + b_ref[0]).astype(o_ref.dtype)

    return kernel


def linear_forward(x, weight, bias, *, x_tile_bytes=4 * 1024 * 1024, tm_max=1024):
    """x: (B, D), weight: (1, D), bias: (1,)  ->  (B, 1)."""
    B, D = x.shape
    assert weight.shape == (1, D)
    assert bias.shape == (1,)

    dtype = x.dtype
    itemsize = jnp.dtype(dtype).itemsize
    sub = max(8, 32 // itemsize)  # sublane multiple: 8 f32 / 16 bf16 / 32 int8

    # ---- batch tile: guarantee >= 2 i-blocks when possible (v7x dual TC) ----
    if B <= sub:
        TM = B  # block == full dim -> always a legal BlockSpec
    else:
        b_ceil = _round_up(B, sub)
        if b_ceil >= 2 * sub:
            tm_cap = _round_up(_cdiv(b_ceil, 2), sub)
        else:
            tm_cap = b_ceil
        TM = min(tm_cap, tm_max)
    grid_i = _cdiv(B, TM)

    # ---- contraction tile: byte-budgeted; grows when TM (batch) is small ----
    if D <= 128:
        TK = D  # block == full dim -> legal, no masking needed
    else:
        # "+ 8" accounts for the sublane-padded (1, TK) weight VMEM buffer.
        budget_rows = (TM + 8) * itemsize
        tk_budget = max(128, (x_tile_bytes // budget_rows) // 128 * 128)
        TK = min(tk_budget, (D // 128) * 128)
    grid_k = _cdiv(D, TK)
    D_pad = grid_k * TK
    mask_k_tail = D_pad != D

    # Only the tiny weight is zero-padded (x is streamed unpadded from HBM).
    w = weight.astype(dtype)
    if D_pad != D:
        w = jnp.pad(w, ((0, 0), (0, D_pad - D)))
    b_smem = bias.astype(jnp.float32)

    kernel = _make_linear_kernel(D, TK, mask_k_tail)

    out = pl.pallas_call(
        kernel,
        out_shape=jax.ShapeDtypeStruct((B, 1), dtype),
        grid_spec=pltpu.PrefetchScalarGridSpec(
            num_scalar_prefetch=0,
            grid=(grid_i, grid_k),
            in_specs=[
                pl.BlockSpec((TM, TK), lambda i, k: (i, k)),          # x tile
                pl.BlockSpec((1, TK), lambda i, k: (0, k)),           # weight
                pl.BlockSpec(memory_space=pltpu.MemorySpace.SMEM),    # bias
            ],
            out_specs=pl.BlockSpec((TM, 1), lambda i, k: (i, 0)),
            scratch_shapes=[pltpu.VMEM((TM, 1), jnp.float32)],
        ),
        compiler_params=pltpu.CompilerParams(
            # batch axis parallel (v7x dual-TC), K reduction arbitrary
            dimension_semantics=("parallel", "arbitrary"),
            # worst case ~2x(4 MiB x) + 2x(4 MiB w) + small: safe on every gen
            vmem_limit_bytes=32 * 1024 * 1024,
        ),
        cost_estimate=pl.CostEstimate(
            flops=2 * B * D,
            transcendentals=0,
            bytes_accessed=itemsize * (B * D + grid_i * D_pad) + 4 * B,
        ),
    )(x, w, b_smem)

    return out


if __name__ == "__main__":
    key = jax.random.PRNGKey(0)
    k_x, k_w, k_b, k_x2, k_x3, k_x4 = jax.random.split(key, 6)

    # --- Primary shapes implied by the module: batch=8, input_dim=32 (f32) ---
    batch, input_dim = 8, 32
    bound = 1.0 / jnp.sqrt(jnp.float32(input_dim))
    weight = jax.random.uniform(k_w, (1, input_dim), jnp.float32, -bound, bound)
    bias = jax.random.uniform(k_b, (1,), jnp.float32, -bound, bound)
    x = jax.random.normal(k_x, (batch, input_dim), jnp.float32)

    y = linear_forward(x, weight, bias)
    jax.block_until_ready(y)
    y_ref = x @ weight.T + bias
    assert y.shape == (batch, 1)
    assert jnp.allclose(y, y_ref, atol=1e-5, rtol=1e-5)

    # --- Ragged B, small D (< 128): full-dim K block + batch-edge clipping ---
    b2, d2 = 10, 100
    w2 = jax.random.uniform(k_w, (1, d2), jnp.float32, -0.1, 0.1)
    bv2 = jax.random.uniform(k_b, (1,), jnp.float32, -0.1, 0.1)
    x2 = jax.random.normal(k_x2, (b2, d2), jnp.float32)
    y2 = linear_forward(x2, w2, bv2)
    jax.block_until_ready(y2)
    assert y2.shape == (b2, 1)
    assert jnp.allclose(y2, x2 @ w2.T + bv2, atol=1e-5, rtol=1e-5)

    # --- D > 128 with D % TK != 0: K tiling + in-kernel tail masking ---
    b3, d3 = 12, 300
    w3 = jax.random.uniform(k_w, (1, d3), jnp.float32, -0.05, 0.05)
    bv3 = jax.random.uniform(k_b, (1,), jnp.float32, -0.05, 0.05)
    x3 = jax.random.normal(k_x3, (b3, d3), jnp.float32)
    y3 = linear_forward(x3, w3, bv3)
    jax.block_until_ready(y3)
    assert y3.shape == (b3, 1)
    assert jnp.allclose(y3, x3 @ w3.T + bv3, atol=1e-4, rtol=1e-4)

    # --- bf16 inputs: dtype-aware sublane rounding, f32 MXU accumulation ---
    b4, d4 = 16, 200
    x4 = jax.random.normal(k_x4, (b4, d4), jnp.float32).astype(jnp.bfloat16)
    w4 = jax.random.uniform(k_w, (1, d4), jnp.float32, -0.05, 0.05).astype(jnp.bfloat16)
    bv4 = jnp.asarray([0.01], jnp.float32)
    y4 = linear_forward(x4, w4, bv4)
    jax.block_until_ready(y4)
    y4_ref = x4.astype(jnp.float32) @ w4.astype(jnp.float32).T + bv4
    assert y4.shape == (b4, 1)
    assert jnp.allclose(y4.astype(jnp.float32), y4_ref, atol=1e-2, rtol=2e-2)

    print("KERNEL_OK")
</pallas_src>

<mosaic_0001>
module attributes {stable_mosaic.version = 11 : i64} {
  func.func @kernel(%arg0: i32, %arg1: i32, %arg2: memref<8x32xf32, #tpu.memory_space<vmem>>, %arg3: memref<1x32xf32, #tpu.memory_space<vmem>>, %arg4: memref<1xf32, #tpu.memory_space<smem>>, %arg5: memref<8x1xf32, #tpu.memory_space<vmem>>, %arg6: memref<8x1xf32, #tpu.memory_space<vmem>>) attributes {dimension_semantics = [#tpu.dimension_semantics<parallel>, #tpu.dimension_semantics<arbitrary>], iteration_bounds = array<i64: 1, 1>, scalar_prefetch = 0 : i64, scratch_operands = 1 : i64, tpu.core_type = #tpu.core_type<tc>, window_params = [{transform_indices = @transform_0, window_bounds = array<i64: 8, 32>}, {transform_indices = @transform_1, window_bounds = array<i64: 1, 32>}, {transform_indices = @transform_2, window_bounds = array<i64: 1>}, {transform_indices = @transform_3, window_bounds = array<i64: 8, 1>}]} {
    %c0_i32 = arith.constant 0 : i32
    %0 = arith.cmpi eq, %arg1, %c0_i32 : i32
    %1 = arith.extui %0 : i1 to i32
    %c0_i32_0 = arith.constant 0 : i32
    %2 = arith.cmpi ne, %1, %c0_i32_0 : i32
    scf.if %2 {
      %cst_10 = arith.constant 0.000000e+00 : f32
      %12 = vector.broadcast %cst_10 : f32 to vector<8x1xf32>
      %c0_11 = arith.constant 0 : index
      %c0_12 = arith.constant 0 : index
      %13 = vector.load %arg6[%c0_11, %c0_12] : memref<8x1xf32, #tpu.memory_space<vmem>>, vector<8x1xf32>
      tpu.vector_store %arg6[%c0_11, %c0_12], %12 {strides = array<i32>} : memref<8x1xf32, #tpu.memory_space<vmem>>, vector<8x1xf32>,
    } else {
    }
    %c0 = arith.constant 0 : index
    %c0_1 = arith.constant 0 : index
    %3 = vector.load %arg2[%c0, %c0_1] : memref<8x32xf32, #tpu.memory_space<vmem>>, vector<8x32xf32>
    %c0_2 = arith.constant 0 : index
    %c0_3 = arith.constant 0 : index
    %4 = vector.load %arg6[%c0_2, %c0_3] : memref<8x1xf32, #tpu.memory_space<vmem>>, vector<8x1xf32>
    %c0_4 = arith.constant 0 : index
    %c0_5 = arith.constant 0 : index
    %5 = vector.load %arg3[%c0_4, %c0_5] : memref<1x32xf32, #tpu.memory_space<vmem>>, vector<1x32xf32>
    %cst = arith.constant dense<0.000000e+00> : vector<8x1xf32>
    %6 = tpu.matmul %3, %5, %cst {dimension_numbers = #tpu.dot_dimension_numbers<[1], [1], [0], [0], [0, 0, 1, 0], [], []>} : vector<8x32xf32>, vector<1x32xf32>, vector<8x1xf32> -> vector<8x1xf32>
    %7 = arith.addf %4, %6 : vector<8x1xf32>
    %c0_6 = arith.constant 0 : index
    %c0_7 = arith.constant 0 : index
    %8 = vector.load %arg6[%c0_6, %c0_7] : memref<8x1xf32, #tpu.memory_space<vmem>>, vector<8x1xf32>
    tpu.vector_store %arg6[%c0_6, %c0_7], %7 {strides = array<i32>} : memref<8x1xf32, #tpu.memory_space<vmem>>, vector<8x1xf32>,
    %c0_i32_8 = arith.constant 0 : i32
    %9 = arith.cmpi eq, %arg1, %c0_i32_8 : i32
    %10 = arith.extui %9 : i1 to i32
    %c0_i32_9 = arith.constant 0 : i32
    %11 = arith.cmpi ne, %10, %c0_i32_9 : i32
    scf.if %11 {
      %c0_10 = arith.constant 0 : index
      %c0_11 = arith.constant 0 : index
      %12 = vector.load %arg6[%c0_10, %c0_11] : memref<8x1xf32, #tpu.memory_space<vmem>>, vector<8x1xf32>
      %c0_12 = arith.constant 0 : index
      %13 = memref.load %arg4[%c0_12] : memref<1xf32, #tpu.memory_space<smem>>
      %14 = vector.broadcast %13 : f32 to vector<8x1xf32>
      %15 = arith.addf %12, %14 : vector<8x1xf32>
      %c0_13 = arith.constant 0 : index
      %c0_14 = arith.constant 0 : index
      %16 = vector.load %arg5[%c0_13, %c0_14] : memref<8x1xf32, #tpu.memory_space<vmem>>, vector<8x1xf32>
      tpu.vector_store %arg5[%c0_13, %c0_14], %15 {strides = array<i32>} : memref<8x1xf32, #tpu.memory_space<vmem>>, vector<8x1xf32>,
    } else {
    }
    return
  }
  func.func @transform_0(%arg0: i32, %arg1: i32) -> (i32, i32) {
    %c0_i32 = arith.constant 0 : i32
    return %arg0, %arg1 : i32, i32
  }
  func.func @transform_1(%arg0: i32, %arg1: i32) -> (i32, i32) {
    %c0_i32 = arith.constant 0 : i32
    %c0_i32_0 = arith.constant 0 : i32
    return %c0_i32, %arg1 : i32, i32
  }
  func.func @transform_2(%arg0: i32, %arg1: i32) -> i32 {
    %c0_i32 = arith.constant 0 : i32
    %c0_i32_0 = arith.constant 0 : i32
    return %c0_i32 : i32
  }
  func.func @transform_3(%arg0: i32, %arg1: i32) -> (i32, i32) {
    %c0_i32 = arith.constant 0 : i32
    %c0_i32_0 = arith.constant 0 : i32
    return %arg0, %c0_i32 : i32, i32
  }
}

</mosaic_0001>

<llo_original>
// kernel: tpu_custom_call.1
$region0: #{tpu_custom_call.1}
  #allocation0 [shape = 'u32[]', space=smem, size = 0x4, offset = 0x4, fixed_abs, tag = 'smem constant byte address 0x4 - core index']
  #allocation1 [shape = 'u32[144,128]{1,0:T(1,128)}', space=vmem, size = 0x12000, scoped, tag = 'internal scratch']
  #allocation2 [shape = 'f32[8,1]{1,0:T(8,128)}', space=vmem, size = 0x1000, scoped, tag = 'scratch operand']
  #allocation3 [shape = 'f32[1]{0:T(128)S(6)}', space=smem, size = 0x200, scoped, tag = 'scoped memory for tpu_custom_call.1']
  %s0 = inlined_call_operand.hbm [shape: f32[8,32], index: 0, kind: input, shape index: {}]
  %s1 = inlined_call_operand.vmem [shape: f32[1,32], index: 1, kind: input, shape index: {}]
  %s2 = inlined_call_operand.<no memory space> [shape: f32[1], index: 2, kind: input, shape index: {}]
  %s3 = inlined_call_operand.vmem [shape: f32[8,1], index: 3, kind: output, shape index: {}]
  %s4 = sld [smem:[#allocation0]]
  $region34: #{tpu_custom_call.1} parent=0
    _
  %s6 = ssub.s32 1, %s4
  %s7 = scalar_select 0, %s6, %s4
  %8 = sst [smem:[#allocation3]] %s2
  $region1: #{tpu_custom_call.1} parent=0
    #allocation4 [shape = 'u8[4096]{0}', space=vmem, size = 0x1000, scoped, tag = 'input window, operand 0, single buffered']
    #allocation5 [shape = 's32[1]{0}', space=sflag, size = 0x4, scoped, tag = 'scoped memory for tpu_custom_call.1']
    %9 = vsyncpa [#allocation5], 0
    // Predicated region
    $region2: #{tpu_custom_call.1} parent=1 // pred_check
      _
    $region3: #{tpu_custom_call.1} parent=1 // pred_check_branch
      %11 = sbr.rel (0) target = $region5
    $region4: #{tpu_custom_call.1} parent=1 // pred_region
      %s13 = ssub.s32 128, 128
      %14 = vsyncadd [#allocation5], %s13
      %s16 = sshll.u32 [#allocation4], 4
      %s17 = int_to_ptr.vmem [resolvable:$true] %s16
      %19 = dma.hbm_to_vmem [thread:$0]  %s0, 128, %s17, [#allocation5]
    $region5: #{tpu_custom_call.1} parent=1 // pred_fallthru
      _
    // Predicated region
    $region6: #{tpu_custom_call.1} parent=1 // pred_check
      _
    $region7: #{tpu_custom_call.1} parent=1 // pred_check_branch
      %21 = sbr.rel (0) target = $region9
    $region8: #{tpu_custom_call.1} parent=1 // pred_region
      _
    $region9: #{tpu_custom_call.1} parent=1 // pred_fallthru
      _
    // Predicated region
    $region10: #{tpu_custom_call.1} parent=1 // pred_check
      _
    $region11: #{tpu_custom_call.1} parent=1 // pred_check_branch
      %23 = sbr.rel (0) target = $region13
    $region12: #{tpu_custom_call.1} parent=1 // pred_region
      _
    $region13: #{tpu_custom_call.1} parent=1 // pred_fallthru
      _
    // Predicated region
    $region14: #{tpu_custom_call.1} parent=1 // pred_check
      _
    $region15: #{tpu_custom_call.1} parent=1 // pred_check_branch
      %25 = sbr.rel (0) target = $region17
    $region16: #{tpu_custom_call.1} parent=1 // pred_region
      %26 = dma.done [#allocation5], 128
    $region17: #{tpu_custom_call.1} parent=1 // pred_fallthru
      _
    %p27 = scmp.eq.s32.totalorder 0, 0
    // Predicated region
    $region18: #{tpu_custom_call.1} parent=1 // pred_check
      %p28 = pneg %p27
    $region19: #{tpu_custom_call.1} parent=1 // pred_check_branch
      %30 = sbr.rel (%p28) target = $region21
    $region20: #{tpu_custom_call.1} parent=1 // pred_region
      %vm31 = vcmask 7168
      %32 = vst.msk [vmem:[#allocation2] sm:$0xff] %vm31, 0.0
    $region21: #{tpu_custom_call.1} parent=1 // pred_fallthru
      _
    %v33 = vld [vmem:[#allocation4] sm:$0xff]
    %v34 = vld [vmem:[#allocation2] sm:$0xff]
    %v35 = vld [vmem:[%s1] sm:$0x1]
    %v37 = vlaneseq
    %v38 = vshrl.u32 %v37, 7
    %v39 = vsub.s32 0, %v38
    %v40 = vrot.slane %v35, %v39
    %v42 = vmul.f32 %v33, %v40
    %vm43 = vcmask 261120
    %v44 = vsel %vm43, %v42, 0.0
    %45 = vadd.xlane.f32.xlu0 %v44
    %v46 = vpop.xlane.xlu0 %45
    %v47 = vadd.f32 %v34, %v46
    %vm48 = vcmask 7168
    %49 = vst.msk [vmem:[#allocation2] sm:$0xff] %vm48, %v47
    // Predicated region
    $region22: #{tpu_custom_call.1} parent=1 // pred_check
      %p50 = pneg %p27
    $region23: #{tpu_custom_call.1} parent=1 // pred_check_branch
      %52 = sbr.rel (%p50) target = $region25
    $region24: #{tpu_custom_call.1} parent=1 // pred_region
      %v53 = vld [vmem:[#allocation2] sm:$0xff]
      %s54 = sld [smem:[#allocation3]]
      %v55 = vstv %s54
      %v56 = vadd.f32 %v53, %v55
      %57 = vst.msk [vmem:[%s3] sm:$0xff] %vm48, %v56
    $region25: #{tpu_custom_call.1} parent=1 // pred_fallthru
      _
    // Predicated region
    $region26: #{tpu_custom_call.1} parent=1 // pred_check
      _
    $region27: #{tpu_custom_call.1} parent=1 // pred_check_branch
      %59 = sbr.rel (0) target = $region29
    $region28: #{tpu_custom_call.1} parent=1 // pred_region
      _
    $region29: #{tpu_custom_call.1} parent=1 // pred_fallthru
      _
    // Predicated region
    $region30: #{tpu_custom_call.1} parent=1 // pred_check
      _
    $region31: #{tpu_custom_call.1} parent=1 // pred_check_branch
      %61 = sbr.rel (0) target = $region33
    $region32: #{tpu_custom_call.1} parent=1 // pred_region
      _
    $region33: #{tpu_custom_call.1} parent=1 // pred_fallthru
      _
    %62 = vsyncpa [#allocation5], 1

</llo_original>
